<compile_context>
chip_gen: v6e
topology: v6e:2x2x1
jax: 0.10.0
libtpu: 0.0.40
codegen_flags: <defaults>
</compile_context>

<pallas_src>
import math

import jax
import jax.numpy as jnp
from jax.experimental import pallas as pl
from jax.experimental.pallas import tpu as pltpu

EPS = 1e-5


# ---------------------------------------------------------------------------
# Fused Pallas kernel.
# ---------------------------------------------------------------------------
def make_wave_block_kernel(plan, num_rates, N, L, out_channels):
    """plan[j] describes fused step j; its two parameter refs are p[2*j], p[2*j+1].

    plan[0]       == ("conv1x1",)                              # convs[0]
    plan[1 + 2*i] in {("dconv_pair", d, K), ("bn_pair",)}      # filter_convs[i] + gate_convs[i]
    plan[2 + 2*i] in {("conv1x1",), ("bn",)}                   # convs[i + 1]
    """
    Co = out_channels
    count = float(N * L)

    def kernel(x_ref, *refs):
        o_ref = refs[-1]
        p = refs[:-1]
        NL = x_ref.shape[1]

        # Lane position within each length-L sequence (hoisted; reused by every dilated conv).
        pos = jax.lax.broadcasted_iota(jnp.int32, (Co, NL), 1) % L

        def param(j):
            return (p[2 * j][...].astype(jnp.float32),
                    p[2 * j + 1][...].astype(jnp.float32))

        def bn_stats(x):
            # Single-pass stats: E[x], E[x^2] (biased variance, training-mode BN).
            s = jnp.sum(x, axis=1, keepdims=True)
            sq = jnp.sum(x * x, axis=1, keepdims=True)
            mean = s * (1.0 / count)
            var = jnp.maximum(sq * (1.0 / count) - mean * mean, 0.0)
            return mean, jax.lax.rsqrt(var + EPS)

        def shift_masked(x, off):
            # y[:, n*L + l] = x[:, n*L + (l + off)] if 0 <= l + off < L else 0
            if off == 0:
                return x
            rolled = pltpu.roll(x, (-off) % NL, axis=1)
            sp = pos + off
            return jnp.where((sp >= 0) & (sp < L), rolled, 0.0)

        def conv1x1(x, W, b):
            return jnp.dot(W, x, preferred_element_type=jnp.float32) + b

        def bn_apply(x, gamma, beta):
            mean, inv = bn_stats(x)
            return (x - mean) * (inv * gamma) + beta

        def sigmoid(x):
            return 0.5 * jnp.tanh(0.5 * x) + 0.5

        # convs[0]: 1x1 conv (in_channels -> out_channels)
        W0, b0 = param(0)
        x = conv1x1(x_ref[...].astype(jnp.float32), W0, b0)
        res = x

        for i in range(num_rates):
            pair_spec = plan[1 + 2 * i]
            post_spec = plan[2 + 2 * i]
            a, b = param(1 + 2 * i)

            if pair_spec[0] == "dconv_pair":
                _, d, K = pair_spec
                pad = d * (K - 1) // 2
                stacked = jnp.concatenate(
                    [shift_masked(x, k * d - pad) for k in range(K)], axis=0)      # (K*Ci, NL)
                fg = jnp.dot(a, stacked, preferred_element_type=jnp.float32) + b   # (2*Co, NL)
                f_pre, g_pre = fg[:Co], fg[Co:]
            else:  # "bn_pair": both branches are BatchNorm over the SAME x -> share stats
                mean, inv = bn_stats(x)
                xn = (x - mean) * inv
                f_pre = xn * a[:Co] + b[:Co]
                g_pre = xn * a[Co:] + b[Co:]

            x = jnp.tanh(f_pre) * sigmoid(g_pre)

            a2, b2 = param(2 + 2 * i)
            x = conv1x1(x, a2, b2) if post_spec[0] == "conv1x1" else bn_apply(x, a2, b2)
            res = res + x

        o_ref[...] = res.astype(o_ref.dtype)

    return kernel


def wave_block_pallas(x, fused_plan, fused_params, num_rates, out_channels):
    """x: (N, C_in, L) -> (N, C_out, L)."""
    N, C_in, L = x.shape
    # Fold batch into the lane axis -> lane-dense (C, N*L) activations / output.
    x2 = jnp.transpose(x, (1, 0, 2)).reshape(C_in, N * L)
    n_in = 1 + len(fused_params)
    # TODO(synk): for production N*C*L sizes, add a grid tiled along N with a two-pass BN
    # (stats kernel then apply kernel) so the training-mode statistics stay exact across tiles.
    out2 = pl.pallas_call(
        make_wave_block_kernel(fused_plan, num_rates, N, L, out_channels),
        out_shape=jax.ShapeDtypeStruct((out_channels, N * L), jnp.float32),
        in_specs=[pl.BlockSpec(memory_space=pltpu.MemorySpace.VMEM)] * n_in,
        out_specs=pl.BlockSpec(memory_space=pltpu.MemorySpace.VMEM),
        compiler_params=pltpu.CompilerParams(vmem_limit_bytes=64 * 1024 * 1024),
    )(x2, *fused_params)
    return jnp.transpose(out2.reshape(out_channels, N, L), (1, 0, 2))


# ---------------------------------------------------------------------------
# Deterministic parameter construction mirroring Wave_Block.__init__, and the
# forward-order module selection (ModuleList quirk preserved).
# ---------------------------------------------------------------------------
def init_wave_block_params(key, in_channels, out_channels, num_rates, kernel_size):
    keys = iter(jax.random.split(key, 256))

    def conv1x1(cin, cout):
        s = 1.0 / math.sqrt(cin)
        W = jax.random.uniform(next(keys), (cout, cin), jnp.float32, -s, s)
        b = jax.random.uniform(next(keys), (cout, 1), jnp.float32, -s, s)
        return (("conv1x1",), [W, b])

    def dconv(cin, cout, K, d):
        s = 1.0 / math.sqrt(cin * K)
        W = jax.random.uniform(next(keys), (K, cout, cin), jnp.float32, -s, s)
        b = jax.random.uniform(next(keys), (cout, 1), jnp.float32, -s, s)
        return (("dconv", d, K), [W, b])

    def bn(c):
        g = 1.0 + 0.1 * jax.random.normal(next(keys), (c, 1), jnp.float32)
        be = 0.1 * jax.random.normal(next(keys), (c, 1), jnp.float32)
        return (("bn",), [g, be])

    convs = [conv1x1(in_channels, out_channels), bn(out_channels)]
    filter_convs, gate_convs = [], []
    for i in range(num_rates):
        d = 2 ** i
        filter_convs += [dconv(out_channels, out_channels, kernel_size, d), bn(out_channels)]
        gate_convs += [dconv(out_channels, out_channels, kernel_size, d), bn(out_channels)]
        convs += [conv1x1(out_channels, out_channels), bn(out_channels)]

    # Modules actually touched by forward(), in evaluation order.
    used = [convs[0]]
    for i in range(num_rates):
        used += [filter_convs[i], gate_convs[i], convs[i + 1]]

    plan = tuple(u[0] for u in used)
    params_flat = [arr for u in used for arr in u[1]]
    return plan, params_flat


def fuse_for_kernel(plan, params_flat, num_rates):
    """Build the fused kernel plan/params: for each rate, stack the K taps along K*Ci and the
    filter/gate branches along 2*Co (dconv case), or stack the two BN gammas/betas (BN case)."""
    ps = [params_flat[2 * j: 2 * j + 2] for j in range(len(plan))]
    fplan = [("conv1x1",)]
    fparams = list(ps[0])
    for i in range(num_rates):
        fspec = plan[1 + 3 * i]
        fpar, gpar, ppar = ps[1 + 3 * i], ps[2 + 3 * i], ps[3 + 3 * i]
        if fspec[0] == "dconv":
            _, d, K = fspec
            Wf, bf = fpar
            Wg, bg = gpar
            Co = Wf.shape[1]
            Wf2 = jnp.transpose(Wf, (1, 0, 2)).reshape(Co, -1)   # (Co, K*Ci), tap-major cols
            Wg2 = jnp.transpose(Wg, (1, 0, 2)).reshape(Co, -1)
            fplan.append(("dconv_pair", d, K))
            fparams += [jnp.concatenate([Wf2, Wg2], axis=0),     # (2*Co, K*Ci)
                        jnp.concatenate([bf, bg], axis=0)]       # (2*Co, 1)
        else:  # both filter_convs[i] and gate_convs[i] are BatchNorm (ModuleList quirk)
            fplan.append(("bn_pair",))
            fparams += [jnp.concatenate([fpar[0], gpar[0]], axis=0),
                        jnp.concatenate([fpar[1], gpar[1]], axis=0)]
        fplan.append(plan[3 + 3 * i])                            # convs[i+1]
        fparams += list(ppar)
    return tuple(fplan), fparams


# ---------------------------------------------------------------------------
# Independent pure-JAX reference (lax.conv_general_dilated) for verification.
# ---------------------------------------------------------------------------
def _ref_apply(spec, params, x):
    if spec[0] == "conv1x1":
        W, b = params
        y = jax.lax.conv_general_dilated(
            x, W[:, :, None], (1,), [(0, 0)],
            dimension_numbers=("NCH", "OIH", "NCH"))
        return y + b[None]
    if spec[0] == "dconv":
        _, d, K = spec
        W, b = params
        Wc = jnp.transpose(W, (1, 2, 0))  # (Co, Ci, K)
        pad = d * (K - 1) // 2
        y = jax.lax.conv_general_dilated(
            x, Wc, (1,), [(pad, pad)], rhs_dilation=(d,),
            dimension_numbers=("NCH", "OIH", "NCH"))
        return y + b[None]
    gamma, beta = params
    mean = x.mean(axis=(0, 2), keepdims=True)
    var = ((x - mean) ** 2).mean(axis=(0, 2), keepdims=True)
    return (x - mean) / jnp.sqrt(var + EPS) * gamma[None] + beta[None]


def ref_forward(x, plan, params_flat, num_rates):
    ps = [params_flat[2 * j: 2 * j + 2] for j in range(len(plan))]
    x = _ref_apply(plan[0], ps[0], x)
    res = x
    for i in range(num_rates):
        f = jnp.tanh(_ref_apply(plan[1 + 3 * i], ps[1 + 3 * i], x))
        g = jax.nn.sigmoid(_ref_apply(plan[2 + 3 * i], ps[2 + 3 * i], x))
        x = f * g
        x = _ref_apply(plan[3 + 3 * i], ps[3 + 3 * i], x)
        res = res + x
    return res


if __name__ == "__main__":
    # Wave_Block(8, 16, dilation_rates=3, kernel_size=3); N*L = 128 -> lane-dense tiles.
    N, C_IN, C_OUT, L = 2, 8, 16, 64
    NUM_RATES, KSIZE = 3, 3

    key = jax.random.PRNGKey(0)
    kx, kp = jax.random.split(key)
    x = jax.random.normal(kx, (N, C_IN, L), jnp.float32)

    plan, params_flat = init_wave_block_params(kp, C_IN, C_OUT, NUM_RATES, KSIZE)
    fused_plan, fused_params = fuse_for_kernel(plan, params_flat, NUM_RATES)

    out = wave_block_pallas(x, fused_plan, fused_params, NUM_RATES, C_OUT)
    out = jax.block_until_ready(out)

    ref = ref_forward(x, plan, params_flat, NUM_RATES)
    assert out.shape == (N, C_OUT, L)
    err = jnp.max(jnp.abs(out - ref))
    assert jnp.allclose(out, ref, atol=2e-4, rtol=2e-4), f"max abs err = {err}"

    print("KERNEL_OK")
</pallas_src>

<mosaic_0001>
module attributes {stable_mosaic.version = 11 : i64} {
  func.func @kernel(%arg0: memref<8x128xf32, #tpu.memory_space<vmem>>, %arg1: memref<16x8xf32, #tpu.memory_space<vmem>>, %arg2: memref<16x1xf32, #tpu.memory_space<vmem>>, %arg3: memref<32x48xf32, #tpu.memory_space<vmem>>, %arg4: memref<32x1xf32, #tpu.memory_space<vmem>>, %arg5: memref<16x1xf32, #tpu.memory_space<vmem>>, %arg6: memref<16x1xf32, #tpu.memory_space<vmem>>, %arg7: memref<32x1xf32, #tpu.memory_space<vmem>>, %arg8: memref<32x1xf32, #tpu.memory_space<vmem>>, %arg9: memref<16x16xf32, #tpu.memory_space<vmem>>, %arg10: memref<16x1xf32, #tpu.memory_space<vmem>>, %arg11: memref<32x48xf32, #tpu.memory_space<vmem>>, %arg12: memref<32x1xf32, #tpu.memory_space<vmem>>, %arg13: memref<16x1xf32, #tpu.memory_space<vmem>>, %arg14: memref<16x1xf32, #tpu.memory_space<vmem>>, %arg15: memref<16x128xf32, #tpu.memory_space<vmem>>) attributes {dimension_semantics = [], scalar_prefetch = 0 : i64, scratch_operands = 0 : i64, tpu.core_type = #tpu.core_type<tc>} {
    %0 = tpu.iota {dimensions = array<i32: 1>} : vector<16x128xi32>
    %c64_i32 = arith.constant 64 : i32
    %c0_i32 = arith.constant 0 : i32
    %1 = arith.cmpi eq, %c64_i32, %c0_i32 : i32
    %c1_i32 = arith.constant 1 : i32
    %2 = arith.select %1, %c1_i32, %c64_i32 : i32
    %3 = vector.broadcast %2 : i32 to vector<16x128xi32>
    %4 = arith.remsi %0, %3 : vector<16x128xi32>
    %c0_i32_0 = arith.constant 0 : i32
    %5 = vector.broadcast %c0_i32_0 : i32 to vector<16x128xi32>
    %6 = arith.cmpi ne, %4, %5 : vector<16x128xi32>
    %c0_i32_1 = arith.constant 0 : i32
    %7 = vector.broadcast %c0_i32_1 : i32 to vector<16x128xi32>
    %8 = arith.cmpi slt, %4, %7 : vector<16x128xi32>
    %c0_i32_2 = arith.constant 0 : i32
    %9 = arith.cmpi slt, %2, %c0_i32_2 : i32
    %10 = vector.broadcast %9 : i1 to vector<16x128xi1>
    %11 = vector.broadcast %10 : vector<16x128xi1> to vector<16x128xi1>
    %12 = arith.xori %8, %11 : vector<16x128xi1>
    %13 = arith.andi %12, %6 : vector<16x128xi1>
    %14 = vector.broadcast %2 : i32 to vector<16x128xi32>
    %15 = arith.addi %4, %14 : vector<16x128xi32>
    %16 = arith.select %13, %15, %4 : vector<16x128xi1>, vector<16x128xi32>
    %c0 = arith.constant 0 : index
    %c0_3 = arith.constant 0 : index
    %17 = vector.load %arg1[%c0, %c0_3] : memref<16x8xf32, #tpu.memory_space<vmem>>, vector<16x8xf32>
    %c0_4 = arith.constant 0 : index
    %c0_5 = arith.constant 0 : index
    %18 = vector.load %arg2[%c0_4, %c0_5] : memref<16x1xf32, #tpu.memory_space<vmem>>, vector<16x1xf32>
    %c0_6 = arith.constant 0 : index
    %c0_7 = arith.constant 0 : index
    %19 = vector.load %arg0[%c0_6, %c0_7] : memref<8x128xf32, #tpu.memory_space<vmem>>, vector<8x128xf32>
    %cst = arith.constant dense<0.000000e+00> : vector<16x128xf32>
    %20 = tpu.matmul %17, %19, %cst {dimension_numbers = #tpu.dot_dimension_numbers<[1], [0], [0], [1], [0, 0, 1, 1], [], []>} : vector<16x8xf32>, vector<8x128xf32>, vector<16x128xf32> -> vector<16x128xf32>
    %21 = vector.broadcast %18 : vector<16x1xf32> to vector<16x128xf32>
    %22 = arith.addf %20, %21 : vector<16x128xf32>
    %c0_8 = arith.constant 0 : index
    %c0_9 = arith.constant 0 : index
    %23 = vector.load %arg3[%c0_8, %c0_9] : memref<32x48xf32, #tpu.memory_space<vmem>>, vector<32x48xf32>
    %c0_10 = arith.constant 0 : index
    %c0_11 = arith.constant 0 : index
    %24 = vector.load %arg4[%c0_10, %c0_11] : memref<32x1xf32, #tpu.memory_space<vmem>>, vector<32x1xf32>
    %c1_i32_12 = arith.constant 1 : i32
    %25 = tpu.dynamic_rotate %22 by %c1_i32_12 dim 1 : vector<16x128xf32>, i32 -> vector<16x128xf32>
    %c-1_i32 = arith.constant -1 : i32
    %26 = vector.broadcast %c-1_i32 : i32 to vector<16x128xi32>
    %27 = arith.addi %16, %26 : vector<16x128xi32>
    %c0_i32_13 = arith.constant 0 : i32
    %28 = vector.broadcast %c0_i32_13 : i32 to vector<16x128xi32>
    %29 = arith.cmpi sge, %27, %28 : vector<16x128xi32>
    %c64_i32_14 = arith.constant 64 : i32
    %30 = vector.broadcast %c64_i32_14 : i32 to vector<16x128xi32>
    %31 = arith.cmpi slt, %27, %30 : vector<16x128xi32>
    %32 = arith.andi %29, %31 : vector<16x128xi1>
    %cst_15 = arith.constant 0.000000e+00 : f32
    %33 = vector.broadcast %cst_15 : f32 to vector<16x128xf32>
    %34 = arith.select %32, %25, %33 : vector<16x128xi1>, vector<16x128xf32>
    %c127_i32 = arith.constant 127 : i32
    %35 = tpu.dynamic_rotate %22 by %c127_i32 dim 1 : vector<16x128xf32>, i32 -> vector<16x128xf32>
    %c1_i32_16 = arith.constant 1 : i32
    %36 = vector.broadcast %c1_i32_16 : i32 to vector<16x128xi32>
    %37 = arith.addi %16, %36 : vector<16x128xi32>
    %c0_i32_17 = arith.constant 0 : i32
    %38 = vector.broadcast %c0_i32_17 : i32 to vector<16x128xi32>
    %39 = arith.cmpi sge, %37, %38 : vector<16x128xi32>
    %c64_i32_18 = arith.constant 64 : i32
    %40 = vector.broadcast %c64_i32_18 : i32 to vector<16x128xi32>
    %41 = arith.cmpi slt, %37, %40 : vector<16x128xi32>
    %42 = arith.andi %39, %41 : vector<16x128xi1>
    %cst_19 = arith.constant 0.000000e+00 : f32
    %43 = vector.broadcast %cst_19 : f32 to vector<16x128xf32>
    %44 = arith.select %42, %35, %43 : vector<16x128xi1>, vector<16x128xf32>
    %45 = tpu.concatenate %34, %22, %44 in 0 : vector<16x128xf32>, vector<16x128xf32>, vector<16x128xf32> -> vector<48x128xf32>
    %cst_20 = arith.constant dense<0.000000e+00> : vector<32x128xf32>
    %46 = tpu.matmul %23, %45, %cst_20 {dimension_numbers = #tpu.dot_dimension_numbers<[1], [0], [0], [1], [0, 0, 1, 1], [], []>} : vector<32x48xf32>, vector<48x128xf32>, vector<32x128xf32> -> vector<32x128xf32>
    %47 = vector.broadcast %24 : vector<32x1xf32> to vector<32x128xf32>
    %48 = arith.addf %46, %47 : vector<32x128xf32>
    %49 = vector.extract_strided_slice %48 {offsets = [0, 0], sizes = [16, 128], strides = [1, 1]} : vector<32x128xf32> to vector<16x128xf32>
    %50 = vector.extract_strided_slice %48 {offsets = [16, 0], sizes = [16, 128], strides = [1, 1]} : vector<32x128xf32> to vector<16x128xf32>
    %51 = math.tanh %49 : vector<16x128xf32>
    %cst_21 = arith.constant 5.000000e-01 : f32
    %52 = vector.broadcast %cst_21 : f32 to vector<16x128xf32>
    %53 = arith.mulf %52, %50 : vector<16x128xf32>
    %54 = math.tanh %53 : vector<16x128xf32>
    %cst_22 = arith.constant 5.000000e-01 : f32
    %55 = vector.broadcast %cst_22 : f32 to vector<16x128xf32>
    %56 = arith.mulf %55, %54 : vector<16x128xf32>
    %cst_23 = arith.constant 5.000000e-01 : f32
    %57 = vector.broadcast %cst_23 : f32 to vector<16x128xf32>
    %58 = arith.addf %56, %57 : vector<16x128xf32>
    %59 = arith.mulf %51, %58 : vector<16x128xf32>
    %c0_24 = arith.constant 0 : index
    %c0_25 = arith.constant 0 : index
    %60 = vector.load %arg5[%c0_24, %c0_25] : memref<16x1xf32, #tpu.memory_space<vmem>>, vector<16x1xf32>
    %c0_26 = arith.constant 0 : index
    %c0_27 = arith.constant 0 : index
    %61 = vector.load %arg6[%c0_26, %c0_27] : memref<16x1xf32, #tpu.memory_space<vmem>>, vector<16x1xf32>
    %cst_28 = arith.constant dense<0.000000e+00> : vector<16xf32>
    %62 = vector.multi_reduction <add>, %59, %cst_28 [1] : vector<16x128xf32> to vector<16xf32>
    %63 = vector.shape_cast %62 : vector<16xf32> to vector<16x1xf32>
    %64 = arith.mulf %59, %59 : vector<16x128xf32>
    %cst_29 = arith.constant dense<0.000000e+00> : vector<16xf32>
    %65 = vector.multi_reduction <add>, %64, %cst_29 [1] : vector<16x128xf32> to vector<16xf32>
    %66 = vector.shape_cast %65 : vector<16xf32> to vector<16x1xf32>
    %cst_30 = arith.constant 7.812500e-03 : f32
    %67 = vector.broadcast %cst_30 : f32 to vector<16x1xf32>
    %68 = arith.mulf %63, %67 : vector<16x1xf32>
    %cst_31 = arith.constant 7.812500e-03 : f32
    %69 = vector.broadcast %cst_31 : f32 to vector<16x1xf32>
    %70 = arith.mulf %66, %69 : vector<16x1xf32>
    %71 = arith.mulf %68, %68 : vector<16x1xf32>
    %72 = arith.subf %70, %71 : vector<16x1xf32>
    %cst_32 = arith.constant 0.000000e+00 : f32
    %73 = vector.broadcast %cst_32 : f32 to vector<16x1xf32>
    %74 = arith.maximumf %72, %73 : vector<16x1xf32>
    %cst_33 = arith.constant 9.99999974E-6 : f32
    %75 = vector.broadcast %cst_33 : f32 to vector<16x1xf32>
    %76 = arith.addf %74, %75 : vector<16x1xf32>
    %77 = math.rsqrt %76 : vector<16x1xf32>
    %78 = vector.broadcast %68 : vector<16x1xf32> to vector<16x128xf32>
    %79 = arith.subf %59, %78 : vector<16x128xf32>
    %80 = arith.mulf %77, %60 : vector<16x1xf32>
    %81 = vector.broadcast %80 : vector<16x1xf32> to vector<16x128xf32>
    %82 = arith.mulf %79, %81 : vector<16x128xf32>
    %83 = vector.broadcast %61 : vector<16x1xf32> to vector<16x128xf32>
    %84 = arith.addf %82, %83 : vector<16x128xf32>
    %85 = arith.addf %22, %84 : vector<16x128xf32>
    %c0_34 = arith.constant 0 : index
    %c0_35 = arith.constant 0 : index
    %86 = vector.load %arg7[%c0_34, %c0_35] : memref<32x1xf32, #tpu.memory_space<vmem>>, vector<32x1xf32>
    %c0_36 = arith.constant 0 : index
    %c0_37 = arith.constant 0 : index
    %87 = vector.load %arg8[%c0_36, %c0_37] : memref<32x1xf32, #tpu.memory_space<vmem>>, vector<32x1xf32>
    %cst_38 = arith.constant dense<0.000000e+00> : vector<16xf32>
    %88 = vector.multi_reduction <add>, %84, %cst_38 [1] : vector<16x128xf32> to vector<16xf32>
    %89 = vector.shape_cast %88 : vector<16xf32> to vector<16x1xf32>
    %90 = arith.mulf %84, %84 : vector<16x128xf32>
    %cst_39 = arith.constant dense<0.000000e+00> : vector<16xf32>
    %91 = vector.multi_reduction <add>, %90, %cst_39 [1] : vector<16x128xf32> to vector<16xf32>
    %92 = vector.shape_cast %91 : vector<16xf32> to vector<16x1xf32>
    %cst_40 = arith.constant 7.812500e-03 : f32
    %93 = vector.broadcast %cst_40 : f32 to vector<16x1xf32>
    %94 = arith.mulf %89, %93 : vector<16x1xf32>
    %cst_41 = arith.constant 7.812500e-03 : f32
    %95 = vector.broadcast %cst_41 : f32 to vector<16x1xf32>
    %96 = arith.mulf %92, %95 : vector<16x1xf32>
    %97 = arith.mulf %94, %94 : vector<16x1xf32>
    %98 = arith.subf %96, %97 : vector<16x1xf32>
    %cst_42 = arith.constant 0.000000e+00 : f32
    %99 = vector.broadcast %cst_42 : f32 to vector<16x1xf32>
    %100 = arith.maximumf %98, %99 : vector<16x1xf32>
    %cst_43 = arith.constant 9.99999974E-6 : f32
    %101 = vector.broadcast %cst_43 : f32 to vector<16x1xf32>
    %102 = arith.addf %100, %101 : vector<16x1xf32>
    %103 = math.rsqrt %102 : vector<16x1xf32>
    %104 = vector.broadcast %94 : vector<16x1xf32> to vector<16x128xf32>
    %105 = arith.subf %84, %104 : vector<16x128xf32>
    %106 = vector.broadcast %103 : vector<16x1xf32> to vector<16x128xf32>
    %107 = arith.mulf %105, %106 : vector<16x128xf32>
    %108 = vector.extract_strided_slice %86 {offsets = [0, 0], sizes = [16, 1], strides = [1, 1]} : vector<32x1xf32> to vector<16x1xf32>
    %109 = vector.broadcast %108 : vector<16x1xf32> to vector<16x128xf32>
    %110 = arith.mulf %107, %109 : vector<16x128xf32>
    %111 = vector.extract_strided_slice %87 {offsets = [0, 0], sizes = [16, 1], strides = [1, 1]} : vector<32x1xf32> to vector<16x1xf32>
    %112 = vector.broadcast %111 : vector<16x1xf32> to vector<16x128xf32>
    %113 = arith.addf %110, %112 : vector<16x128xf32>
    %114 = vector.extract_strided_slice %86 {offsets = [16, 0], sizes = [16, 1], strides = [1, 1]} : vector<32x1xf32> to vector<16x1xf32>
    %115 = vector.broadcast %114 : vector<16x1xf32> to vector<16x128xf32>
    %116 = arith.mulf %107, %115 : vector<16x128xf32>
    %117 = vector.extract_strided_slice %87 {offsets = [16, 0], sizes = [16, 1], strides = [1, 1]} : vector<32x1xf32> to vector<16x1xf32>
    %118 = vector.broadcast %117 : vector<16x1xf32> to vector<16x128xf32>
    %119 = arith.addf %116, %118 : vector<16x128xf32>
    %120 = math.tanh %113 : vector<16x128xf32>
    %cst_44 = arith.constant 5.000000e-01 : f32
    %121 = vector.broadcast %cst_44 : f32 to vector<16x128xf32>
    %122 = arith.mulf %121, %119 : vector<16x128xf32>
    %123 = math.tanh %122 : vector<16x128xf32>
    %cst_45 = arith.constant 5.000000e-01 : f32
    %124 = vector.broadcast %cst_45 : f32 to vector<16x128xf32>
    %125 = arith.mulf %124, %123 : vector<16x128xf32>
    %cst_46 = arith.constant 5.000000e-01 : f32
    %126 = vector.broadcast %cst_46 : f32 to vector<16x128xf32>
    %127 = arith.addf %125, %126 : vector<16x128xf32>
    %128 = arith.mulf %120, %127 : vector<16x128xf32>
    %c0_47 = arith.constant 0 : index
    %c0_48 = arith.constant 0 : index
    %129 = vector.load %arg9[%c0_47, %c0_48] : memref<16x16xf32, #tpu.memory_space<vmem>>, vector<16x16xf32>
    %c0_49 = arith.constant 0 : index
    %c0_50 = arith.constant 0 : index
    %130 = vector.load %arg10[%c0_49, %c0_50] : memref<16x1xf32, #tpu.memory_space<vmem>>, vector<16x1xf32>
    %cst_51 = arith.constant dense<0.000000e+00> : vector<16x128xf32>
    %131 = tpu.matmul %129, %128, %cst_51 {dimension_numbers = #tpu.dot_dimension_numbers<[1], [0], [0], [1], [0, 0, 1, 1], [], []>} : vector<16x16xf32>, vector<16x128xf32>, vector<16x128xf32> -> vector<16x128xf32>
    %132 = vector.broadcast %130 : vector<16x1xf32> to vector<16x128xf32>
    %133 = arith.addf %131, %132 : vector<16x128xf32>
    %134 = arith.addf %85, %133 : vector<16x128xf32>
    %c0_52 = arith.constant 0 : index
    %c0_53 = arith.constant 0 : index
    %135 = vector.load %arg11[%c0_52, %c0_53] : memref<32x48xf32, #tpu.memory_space<vmem>>, vector<32x48xf32>
    %c0_54 = arith.constant 0 : index
    %c0_55 = arith.constant 0 : index
    %136 = vector.load %arg12[%c0_54, %c0_55] : memref<32x1xf32, #tpu.memory_space<vmem>>, vector<32x1xf32>
    %c2_i32 = arith.constant 2 : i32
    %137 = tpu.dynamic_rotate %133 by %c2_i32 dim 1 : vector<16x128xf32>, i32 -> vector<16x128xf32>
    %c-2_i32 = arith.constant -2 : i32
    %138 = vector.broadcast %c-2_i32 : i32 to vector<16x128xi32>
    %139 = arith.addi %16, %138 : vector<16x128xi32>
    %c0_i32_56 = arith.constant 0 : i32
    %140 = vector.broadcast %c0_i32_56 : i32 to vector<16x128xi32>
    %141 = arith.cmpi sge, %139, %140 : vector<16x128xi32>
    %c64_i32_57 = arith.constant 64 : i32
    %142 = vector.broadcast %c64_i32_57 : i32 to vector<16x128xi32>
    %143 = arith.cmpi slt, %139, %142 : vector<16x128xi32>
    %144 = arith.andi %141, %143 : vector<16x128xi1>
    %cst_58 = arith.constant 0.000000e+00 : f32
    %145 = vector.broadcast %cst_58 : f32 to vector<16x128xf32>
    %146 = arith.select %144, %137, %145 : vector<16x128xi1>, vector<16x128xf32>
    %c126_i32 = arith.constant 126 : i32
    %147 = tpu.dynamic_rotate %133 by %c126_i32 dim 1 : vector<16x128xf32>, i32 -> vector<16x128xf32>
    %c2_i32_59 = arith.constant 2 : i32
    %148 = vector.broadcast %c2_i32_59 : i32 to vector<16x128xi32>
    %149 = arith.addi %16, %148 : vector<16x128xi32>
    %c0_i32_60 = arith.constant 0 : i32
    %150 = vector.broadcast %c0_i32_60 : i32 to vector<16x128xi32>
    %151 = arith.cmpi sge, %149, %150 : vector<16x128xi32>
    %c64_i32_61 = arith.constant 64 : i32
    %152 = vector.broadcast %c64_i32_61 : i32 to vector<16x128xi32>
    %153 = arith.cmpi slt, %149, %152 : vector<16x128xi32>
    %154 = arith.andi %151, %153 : vector<16x128xi1>
    %cst_62 = arith.constant 0.000000e+00 : f32
    %155 = vector.broadcast %cst_62 : f32 to vector<16x128xf32>
    %156 = arith.select %154, %147, %155 : vector<16x128xi1>, vector<16x128xf32>
    %157 = tpu.concatenate %146, %133, %156 in 0 : vector<16x128xf32>, vector<16x128xf32>, vector<16x128xf32> -> vector<48x128xf32>
    %cst_63 = arith.constant dense<0.000000e+00> : vector<32x128xf32>
    %158 = tpu.matmul %135, %157, %cst_63 {dimension_numbers = #tpu.dot_dimension_numbers<[1], [0], [0], [1], [0, 0, 1, 1], [], []>} : vector<32x48xf32>, vector<48x128xf32>, vector<32x128xf32> -> vector<32x128xf32>
    %159 = vector.broadcast %136 : vector<32x1xf32> to vector<32x128xf32>
    %160 = arith.addf %158, %159 : vector<32x128xf32>
    %161 = vector.extract_strided_slice %160 {offsets = [0, 0], sizes = [16, 128], strides = [1, 1]} : vector<32x128xf32> to vector<16x128xf32>
    %162 = vector.extract_strided_slice %160 {offsets = [16, 0], sizes = [16, 128], strides = [1, 1]} : vector<32x128xf32> to vector<16x128xf32>
    %163 = math.tanh %161 : vector<16x128xf32>
    %cst_64 = arith.constant 5.000000e-01 : f32
    %164 = vector.broadcast %cst_64 : f32 to vector<16x128xf32>
    %165 = arith.mulf %164, %162 : vector<16x128xf32>
    %166 = math.tanh %165 : vector<16x128xf32>
    %cst_65 = arith.constant 5.000000e-01 : f32
    %167 = vector.broadcast %cst_65 : f32 to vector<16x128xf32>
    %168 = arith.mulf %167, %166 : vector<16x128xf32>
    %cst_66 = arith.constant 5.000000e-01 : f32
    %169 = vector.broadcast %cst_66 : f32 to vector<16x128xf32>
    %170 = arith.addf %168, %169 : vector<16x128xf32>
    %171 = arith.mulf %163, %170 : vector<16x128xf32>
    %c0_67 = arith.constant 0 : index
    %c0_68 = arith.constant 0 : index
    %172 = vector.load %arg13[%c0_67, %c0_68] : memref<16x1xf32, #tpu.memory_space<vmem>>, vector<16x1xf32>
    %c0_69 = arith.constant 0 : index
    %c0_70 = arith.constant 0 : index
    %173 = vector.load %arg14[%c0_69, %c0_70] : memref<16x1xf32, #tpu.memory_space<vmem>>, vector<16x1xf32>
    %cst_71 = arith.constant dense<0.000000e+00> : vector<16xf32>
    %174 = vector.multi_reduction <add>, %171, %cst_71 [1] : vector<16x128xf32> to vector<16xf32>
    %175 = vector.shape_cast %174 : vector<16xf32> to vector<16x1xf32>
    %176 = arith.mulf %171, %171 : vector<16x128xf32>
    %cst_72 = arith.constant dense<0.000000e+00> : vector<16xf32>
    %177 = vector.multi_reduction <add>, %176, %cst_72 [1] : vector<16x128xf32> to vector<16xf32>
    %178 = vector.shape_cast %177 : vector<16xf32> to vector<16x1xf32>
    %cst_73 = arith.constant 7.812500e-03 : f32
    %179 = vector.broadcast %cst_73 : f32 to vector<16x1xf32>
    %180 = arith.mulf %175, %179 : vector<16x1xf32>
    %cst_74 = arith.constant 7.812500e-03 : f32
    %181 = vector.broadcast %cst_74 : f32 to vector<16x1xf32>
    %182 = arith.mulf %178, %181 : vector<16x1xf32>
    %183 = arith.mulf %180, %180 : vector<16x1xf32>
    %184 = arith.subf %182, %183 : vector<16x1xf32>
    %cst_75 = arith.constant 0.000000e+00 : f32
    %185 = vector.broadcast %cst_75 : f32 to vector<16x1xf32>
    %186 = arith.maximumf %184, %185 : vector<16x1xf32>
    %cst_76 = arith.constant 9.99999974E-6 : f32
    %187 = vector.broadcast %cst_76 : f32 to vector<16x1xf32>
    %188 = arith.addf %186, %187 : vector<16x1xf32>
    %189 = math.rsqrt %188 : vector<16x1xf32>
    %190 = vector.broadcast %180 : vector<16x1xf32> to vector<16x128xf32>
    %191 = arith.subf %171, %190 : vector<16x128xf32>
    %192 = arith.mulf %189, %172 : vector<16x1xf32>
    %193 = vector.broadcast %192 : vector<16x1xf32> to vector<16x128xf32>
    %194 = arith.mulf %191, %193 : vector<16x128xf32>
    %195 = vector.broadcast %173 : vector<16x1xf32> to vector<16x128xf32>
    %196 = arith.addf %194, %195 : vector<16x128xf32>
    %197 = arith.addf %134, %196 : vector<16x128xf32>
    %c0_77 = arith.constant 0 : index
    %c0_78 = arith.constant 0 : index
    %198 = vector.load %arg15[%c0_77, %c0_78] : memref<16x128xf32, #tpu.memory_space<vmem>>, vector<16x128xf32>
    tpu.vector_store %arg15[%c0_77, %c0_78], %197 {strides = array<i32>} : memref<16x128xf32, #tpu.memory_space<vmem>>, vector<16x128xf32>,
    return
  }
}

</mosaic_0001>

<llo_original>
// kernel: tpu_custom_call.1
$region0: #{tpu_custom_call.1}
  #allocation0 [shape = 'u32[]', space=smem, size = 0x4, offset = 0x4, fixed_abs, tag = 'smem constant byte address 0x4 - core index']
  #allocation1 [shape = 'u32[144,128]{1,0:T(1,128)}', space=vmem, size = 0x12000, scoped, tag = 'internal scratch']
  %s0 = inlined_call_operand.vmem [shape: f32[8,128], index: 0, kind: input, shape index: {}]
  %s1 = inlined_call_operand.vmem [shape: f32[16,8], index: 1, kind: input, shape index: {}]
  %s2 = inlined_call_operand.vmem [shape: f32[16,1], index: 2, kind: input, shape index: {}]
  %s3 = inlined_call_operand.vmem [shape: f32[32,48], index: 3, kind: input, shape index: {}]
  %s4 = inlined_call_operand.vmem [shape: f32[32,1], index: 4, kind: input, shape index: {}]
  %s5 = inlined_call_operand.vmem [shape: f32[16,1], index: 5, kind: input, shape index: {}]
  %s6 = inlined_call_operand.vmem [shape: f32[16,1], index: 6, kind: input, shape index: {}]
  %s7 = inlined_call_operand.vmem [shape: f32[32,1], index: 7, kind: input, shape index: {}]
  %s8 = inlined_call_operand.vmem [shape: f32[32,1], index: 8, kind: input, shape index: {}]
  %s9 = inlined_call_operand.vmem [shape: f32[16,16], index: 9, kind: input, shape index: {}]
  %s10 = inlined_call_operand.vmem [shape: f32[16,1], index: 10, kind: input, shape index: {}]
  %s11 = inlined_call_operand.vmem [shape: f32[32,48], index: 11, kind: input, shape index: {}]
  %s12 = inlined_call_operand.vmem [shape: f32[32,1], index: 12, kind: input, shape index: {}]
  %s13 = inlined_call_operand.vmem [shape: f32[16,1], index: 13, kind: input, shape index: {}]
  %s14 = inlined_call_operand.vmem [shape: f32[16,1], index: 14, kind: input, shape index: {}]
  %s15 = inlined_call_operand.hbm [shape: f32[16,128], index: 15, kind: output, shape index: {}]
  %s16 = sld [smem:[#allocation0]]
  $region70: #{tpu_custom_call.1} parent=0
    _
  %s18 = ssub.s32 1, %s16
  %s19 = scalar_select 0, %s18, %s16
  $region1: #{tpu_custom_call.1} parent=0
    #allocation2 [shape = 'u8[8192]{0}', space=vmem, size = 0x2000, scoped, tag = 'output window, operand 0, single buffered']
    #allocation3 [shape = 's32[1]{0}', space=sflag, size = 0x4, scoped, tag = 'scoped memory for tpu_custom_call.1']
    %20 = vsyncpa [#allocation3], 0
    // Predicated region
    $region2: #{tpu_custom_call.1} parent=1 // pred_check
      _
    $region3: #{tpu_custom_call.1} parent=1 // pred_check_branch
      %22 = sbr.rel (0) target = $region5
    $region4: #{tpu_custom_call.1} parent=1 // pred_region
      _
    $region5: #{tpu_custom_call.1} parent=1 // pred_fallthru
      _
    // Predicated region
    $region6: #{tpu_custom_call.1} parent=1 // pred_check
      _
    $region7: #{tpu_custom_call.1} parent=1 // pred_check_branch
      %24 = sbr.rel (0) target = $region9
    $region8: #{tpu_custom_call.1} parent=1 // pred_region
      _
    $region9: #{tpu_custom_call.1} parent=1 // pred_fallthru
      _
    // Predicated region
    $region10: #{tpu_custom_call.1} parent=1 // pred_check
      _
    $region11: #{tpu_custom_call.1} parent=1 // pred_check_branch
      %26 = sbr.rel (0) target = $region13
    $region12: #{tpu_custom_call.1} parent=1 // pred_region
      _
    $region13: #{tpu_custom_call.1} parent=1 // pred_fallthru
      _
    // Predicated region
    $region14: #{tpu_custom_call.1} parent=1 // pred_check
      _
    $region15: #{tpu_custom_call.1} parent=1 // pred_check_branch
      %28 = sbr.rel (0) target = $region17
    $region16: #{tpu_custom_call.1} parent=1 // pred_region
      _
    $region17: #{tpu_custom_call.1} parent=1 // pred_fallthru
      _
    // Predicated region
    $region18: #{tpu_custom_call.1} parent=1 // pred_check
      _
    $region19: #{tpu_custom_call.1} parent=1 // pred_check_branch
      %30 = sbr.rel (0) target = $region21
    $region20: #{tpu_custom_call.1} parent=1 // pred_region
      _
    $region21: #{tpu_custom_call.1} parent=1 // pred_fallthru
      _
    // Predicated region
    $region22: #{tpu_custom_call.1} parent=1 // pred_check
      _
    $region23: #{tpu_custom_call.1} parent=1 // pred_check_branch
      %32 = sbr.rel (0) target = $region25
    $region24: #{tpu_custom_call.1} parent=1 // pred_region
      _
    $region25: #{tpu_custom_call.1} parent=1 // pred_fallthru
      _
    // Predicated region
    $region26: #{tpu_custom_call.1} parent=1 // pred_check
      _
    $region27: #{tpu_custom_call.1} parent=1 // pred_check_branch
      %34 = sbr.rel (0) target = $region29
    $region28: #{tpu_custom_call.1} parent=1 // pred_region
      _
    $region29: #{tpu_custom_call.1} parent=1 // pred_fallthru
      _
    // Predicated region
    $region30: #{tpu_custom_call.1} parent=1 // pred_check
      _
    $region31: #{tpu_custom_call.1} parent=1 // pred_check_branch
      %36 = sbr.rel (0) target = $region33
    $region32: #{tpu_custom_call.1} parent=1 // pred_region
      _
    $region33: #{tpu_custom_call.1} parent=1 // pred_fallthru
      _
    // Predicated region
    $region34: #{tpu_custom_call.1} parent=1 // pred_check
      _
    $region35: #{tpu_custom_call.1} parent=1 // pred_check_branch
      %38 = sbr.rel (0) target = $region37
    $region36: #{tpu_custom_call.1} parent=1 // pred_region
      _
    $region37: #{tpu_custom_call.1} parent=1 // pred_fallthru
      _
    // Predicated region
    $region38: #{tpu_custom_call.1} parent=1 // pred_check
      _
    $region39: #{tpu_custom_call.1} parent=1 // pred_check_branch
      %40 = sbr.rel (0) target = $region41
    $region40: #{tpu_custom_call.1} parent=1 // pred_region
      _
    $region41: #{tpu_custom_call.1} parent=1 // pred_fallthru
      _
    // Predicated region
    $region42: #{tpu_custom_call.1} parent=1 // pred_check
      _
    $region43: #{tpu_custom_call.1} parent=1 // pred_check_branch
      %42 = sbr.rel (0) target = $region45
    $region44: #{tpu_custom_call.1} parent=1 // pred_region
      _
    $region45: #{tpu_custom_call.1} parent=1 // pred_fallthru
      _
    // Predicated region
    $region46: #{tpu_custom_call.1} parent=1 // pred_check
      _
    $region47: #{tpu_custom_call.1} parent=1 // pred_check_branch
      %44 = sbr.rel (0) target = $region49
    $region48: #{tpu_custom_call.1} parent=1 // pred_region
      _
    $region49: #{tpu_custom_call.1} parent=1 // pred_fallthru
      _
    // Predicated region
    $region50: #{tpu_custom_call.1} parent=1 // pred_check
      _
    $region51: #{tpu_custom_call.1} parent=1 // pred_check_branch
      %46 = sbr.rel (0) target = $region53
    $region52: #{tpu_custom_call.1} parent=1 // pred_region
      _
    $region53: #{tpu_custom_call.1} parent=1 // pred_fallthru
      _
    // Predicated region
    $region54: #{tpu_custom_call.1} parent=1 // pred_check
      _
    $region55: #{tpu_custom_call.1} parent=1 // pred_check_branch
      %48 = sbr.rel (0) target = $region57
    $region56: #{tpu_custom_call.1} parent=1 // pred_region
      _
    $region57: #{tpu_custom_call.1} parent=1 // pred_fallthru
      _
    // Predicated region
    $region58: #{tpu_custom_call.1} parent=1 // pred_check
      _
    $region59: #{tpu_custom_call.1} parent=1 // pred_check_branch
      %50 = sbr.rel (0) target = $region61
    $region60: #{tpu_custom_call.1} parent=1 // pred_region
      _
    $region61: #{tpu_custom_call.1} parent=1 // pred_fallthru
      _
    %v51 = vlaneseq
    %v52 = vand.u32 %v51, 127
    %vm53 = vcmp.lt.s32.totalorder %v52, 0
    %v54 = vsub.s32 0, %v52
    %v55 = vsel %vm53, %v54, %v52
    %v56 = vshrl.u32 %v55, 6
    %v57 = vand.u32 %v55, 63
    %v58 = vsub.s32 0, %v57
    %v59 = vsel %vm53, %v58, %v57
    %vm60 = vcmp.ne.s32.totalorder %v59, 0
    %vm61 = vcmp.lt.s32.totalorder %v59, 0
    %vm62 = vmand %vm61, %vm60
    %v63 = vadd.s32 %v59, 64
    %v64 = vsel %vm62, %v63, %v59
    %v65 = vld [vmem:[%s1] sm:$0xff]
    %v66 = vld [vmem:[%s1 + $0x8] sm:$0xff]
    %v67 = vld [vmem:[%s2] sm:$0xff]
    %v68 = vld [vmem:[%s2 + $0x8] sm:$0xff]
    %v69 = vld [vmem:[%s0] sm:$0xff]
    %71 = vset.pattern.permute.xlu0 0
    %72 = vperm.xlu0 %71, %v67
    %v73 = vpop.permute.xlu0 %72
    %76 = vset.pattern.permute.xlu0 0
    %77 = vperm.xlu0 %76, %v68
    %v78 = vpop.permute.xlu0 %77
    %vm80 = vcmask 64512
    %v82 = vsel %vm80, %v65, 0
    %v85 = vsel %vm80, %v66, 0
    %87 = vmatprep.subr.mxu0 0.0
    %88 = vmatpush1.msra.mxu0 0.0
    %89 = vmatprep.subr.mxu0 0.0
    %90 = vmatpush1.msra.mxu0 0.0
    %91 = vmatprep.subr.mxu0 0.0
    %92 = vmatpush1.msra.mxu0 0.0
    %93 = vmatprep.subr.mxu0 0.0
    %94 = vmatpush1.msra.mxu0 0.0
    %95 = vmatprep.subr.mxu0 0.0
    %96 = vmatpush1.msra.mxu0 0.0
    %97 = vmatprep.subr.mxu0 0.0
    %98 = vmatpush1.msra.mxu0 0.0
    %99 = vmatprep.subr.mxu0 0.0
    %100 = vmatpush1.msra.mxu0 0.0
    %101 = vmatprep.subr.mxu0 0.0
    %102 = vmatpush1.msra.mxu0 0.0
    %103 = vmatprep.subr.mxu0 0.0
    %104 = vmatpush1.msra.mxu0 0.0
    %105 = vmatprep.subr.mxu0 0.0
    %106 = vmatpush1.msra.mxu0 0.0
    %107 = vmatprep.subr.mxu0 0.0
    %108 = vmatpush1.msra.mxu0 0.0
    %109 = vmatprep.subr.mxu0 0.0
    %110 = vmatpush1.msra.mxu0 0.0
    %111 = vmatprep.subr.mxu0 0.0
    %112 = vmatpush1.msra.mxu0 0.0
    %113 = vmatprep.subr.mxu0 0.0
    %114 = vmatpush1.msra.mxu0 0.0
    %115 = vmatprep.subr.mxu0 0.0
    %116 = vmatpush1.msra.mxu0 0.0
    %117 = vmatprep.subr.mxu0 0.0
    %118 = vmatpush1.msra.mxu0 %v69
    %119 = vmatprep.subr.mxu0 0.0
    %120 = vmatpush2.msra.mxu0 0.0
    %121 = vmatprep.subr.mxu0 0.0
    %122 = vmatpush2.msra.mxu0 0.0
    %123 = vmatprep.subr.mxu0 0.0
    %124 = vmatpush2.msra.mxu0 0.0
    %125 = vmatprep.subr.mxu0 0.0
    %126 = vmatpush2.msra.mxu0 0.0
    %127 = vmatprep.subr.mxu0 0.0
    %128 = vmatpush2.msra.mxu0 0.0
    %129 = vmatprep.subr.mxu0 0.0
    %130 = vmatpush2.msra.mxu0 0.0
    %131 = vmatprep.subr.mxu0 0.0
    %132 = vmatpush2.msra.mxu0 0.0
    %133 = vmatprep.subr.mxu0 0.0
    %134 = vmatpush2.msra.mxu0 0.0
    %135 = vmatprep.subr.mxu0 0.0
    %136 = vmatpush2.msra.mxu0 0.0
    %137 = vmatprep.subr.mxu0 0.0
    %138 = vmatpush2.msra.mxu0 0.0
    %139 = vmatprep.subr.mxu0 0.0
    %140 = vmatpush2.msra.mxu0 0.0
    %141 = vmatprep.subr.mxu0 0.0
    %142 = vmatpush2.msra.mxu0 0.0
    %143 = vmatprep.subr.mxu0 0.0
    %144 = vmatpush2.msra.mxu0 0.0
    %145 = vmatprep.subr.mxu0 0.0
    %146 = vmatpush2.msra.mxu0 0.0
    %147 = vmatprep.subr.mxu0 0.0
    %148 = vmatpush2.msra.mxu0 0.0
    %149 = vmatprep.subr.mxu0 0.0
    %150 = vmatpush2.msra.mxu0 0.0
    %151 = vmatprep.mubr.f32.mxu0 0.0
    %152 = vmatmul.mubr.f32.gmra.mxu0 %v82
    %v153 = vpop.f32.mrf.mxu0
    %v154 = vadd.f32 %v73, %v153
    %v155 = vpop.f32.mrf.mxu0
    %156 = vmatprep.mubr.f32.mxu0 0.0
    %157 = vmatmul.mubr.f32.gmra.mxu0 %v85
    %v158 = vpop.f32.mrf.mxu0
    %v159 = vadd.f32 %v78, %v158
    %v160 = vpop.f32.mrf.mxu0
    %161 = vdwg.mxu0
    %v162 = vld [vmem:[%s3] sm:$0xff]
    %v163 = vld [vmem:[%s3 + $0x8] sm:$0xff]
    %v164 = vld [vmem:[%s3 + $0x10] sm:$0xff]
    %v165 = vld [vmem:[%s3 + $0x18] sm:$0xff]
    %v166 = vld [vmem:[%s4] sm:$0xff]
    %v167 = vld [vmem:[%s4 + $0x8] sm:$0xff]
    %v168 = vld [vmem:[%s4 + $0x10] sm:$0xff]
    %v169 = vld [vmem:[%s4 + $0x18] sm:$0xff]
    %170 = vrot.lane.b32.xlu0 %v154, 1
    %v171 = vpop.permute.xlu0 %170
    %172 = vrot.lane.b32.xlu0 %v159, 1
    %v173 = vpop.permute.xlu0 %172
    %v174 = vadd.s32 %v64, 4294967295
    %vm175 = vcmp.ge.s32.totalorder %v174, 0
    %vm176 = vcmp.lt.s32.totalorder %v174, 64
    %vm177 = vmand %vm175, %vm176
    %v178 = vsel %vm177, %v171, 0.0
    %v179 = vsel %vm177, %v173, 0.0
    %180 = vrot.lane.b32.xlu0 %v154, 127
    %v181 = vpop.permute.xlu0 %180
    %182 = vrot.lane.b32.xlu0 %v159, 127
    %v183 = vpop.permute.xlu0 %182
    %v184 = vadd.s32 %v64, 1
    %vm185 = vcmp.ge.s32.totalorder %v184, 0
    %vm186 = vcmp.lt.s32.totalorder %v184, 64
    %vm187 = vmand %vm185, %vm186
    %v188 = vsel %vm187, %v181, 0.0
    %v189 = vsel %vm187, %v183, 0.0
    %191 = vset.pattern.permute.xlu0 0
    %192 = vperm.xlu0 %191, %v166
    %v193 = vpop.permute.xlu0 %192
    %196 = vset.pattern.permute.xlu0 0
    %197 = vperm.xlu0 %196, %v167
    %v198 = vpop.permute.xlu0 %197
    %201 = vset.pattern.permute.xlu0 0
    %202 = vperm.xlu0 %201, %v168
    %v203 = vpop.permute.xlu0 %202
    %206 = vset.pattern.permute.xlu0 0
    %207 = vperm.xlu0 %206, %v169
    %v208 = vpop.permute.xlu0 %207
    %vm210 = vcmask 392192
    %v212 = vsel %vm210, %v162, 0
    %v215 = vsel %vm210, %v163, 0
    %v218 = vsel %vm210, %v164, 0
    %v221 = vsel %vm210, %v165, 0
    %223 = vmatprep.subr.mxu0 0.0
    %224 = vmatpush1.msra.mxu0 0.0
    %225 = vmatprep.subr.mxu0 0.0
    %226 = vmatpush1.msra.mxu0 0.0
    %227 = vmatprep.subr.mxu0 0.0
    %228 = vmatpush1.msra.mxu0 0.0
    %229 = vmatprep.subr.mxu0 0.0
    %230 = vmatpush1.msra.mxu0 0.0
    %231 = vmatprep.subr.mxu0 0.0
    %232 = vmatpush1.msra.mxu0 0.0
    %233 = vmatprep.subr.mxu0 0.0
    %234 = vmatpush1.msra.mxu0 0.0
    %235 = vmatprep.subr.mxu0 0.0
    %236 = vmatpush1.msra.mxu0 0.0
    %237 = vmatprep.subr.mxu0 0.0
    %238 = vmatpush1.msra.mxu0 0.0
    %239 = vmatprep.subr.mxu0 0.0
    %240 = vmatpush1.msra.mxu0 0.0
    %241 = vmatprep.subr.mxu0 0.0
    %242 = vmatpush1.msra.mxu0 0.0
    %243 = vmatprep.subr.mxu0 0.0
    %244 = vmatpush1.msra.mxu0 %v189
    %245 = vmatprep.subr.mxu0 0.0
    %246 = vmatpush1.msra.mxu0 %v188
    %247 = vmatprep.subr.mxu0 0.0
    %248 = vmatpush1.msra.mxu0 %v159
    %249 = vmatprep.subr.mxu0 0.0
    %250 = vmatpush1.msra.mxu0 %v154
    %251 = vmatprep.subr.mxu0 0.0
    %252 = vmatpush1.msra.mxu0 %v179
    %253 = vmatprep.subr.mxu0 0.0
    %254 = vmatpush1.msra.mxu0 %v178
    %255 = vmatprep.subr.mxu0 0.0
    %256 = vmatpush2.msra.mxu0 0.0
    %257 = vmatprep.subr.mxu0 0.0
    %258 = vmatpush2.msra.mxu0 0.0
    %259 = vmatprep.subr.mxu0 0.0
    %260 = vmatpush2.msra.mxu0 0.0
    %261 = vmatprep.subr.mxu0 0.0
    %262 = vmatpush2.msra.mxu0 0.0
    %263 = vmatprep.subr.mxu0 0.0
    %264 = vmatpush2.msra.mxu0 0.0
    %265 = vmatprep.subr.mxu0 0.0
    %266 = vmatpush2.msra.mxu0 0.0
    %267 = vmatprep.subr.mxu0 0.0
    %268 = vmatpush2.msra.mxu0 0.0
    %269 = vmatprep.subr.mxu0 0.0
    %270 = vmatpush2.msra.mxu0 0.0
    %271 = vmatprep.subr.mxu0 0.0
    %272 = vmatpush2.msra.mxu0 0.0
    %273 = vmatprep.subr.mxu0 0.0
    %274 = vmatpush2.msra.mxu0 0.0
    %275 = vmatprep.subr.mxu0 0.0
    %276 = vmatpush2.msra.mxu0 0.0
    %277 = vmatprep.subr.mxu0 0.0
    %278 = vmatpush2.msra.mxu0 0.0
    %279 = vmatprep.subr.mxu0 0.0
    %280 = vmatpush2.msra.mxu0 0.0
    %281 = vmatprep.subr.mxu0 0.0
    %282 = vmatpush2.msra.mxu0 0.0
    %283 = vmatprep.subr.mxu0 0.0
    %284 = vmatpush2.msra.mxu0 0.0
    %285 = vmatprep.subr.mxu0 0.0
    %286 = vmatpush2.msra.mxu0 0.0
    %287 = vmatprep.mubr.f32.mxu0 0.0
    %288 = vmatmul.mubr.f32.gmra.mxu0 %v212
    %v289 = vpop.f32.mrf.mxu0
    %v290 = vadd.f32 %v193, %v289
    %v291 = vpop.f32.mrf.mxu0
    %292 = vmatprep.mubr.f32.mxu0 0.0
    %293 = vmatmul.mubr.f32.gmra.mxu0 %v215
    %v294 = vpop.f32.mrf.mxu0
    %v295 = vadd.f32 %v198, %v294
    %v296 = vpop.f32.mrf.mxu0
    %297 = vmatprep.mubr.f32.mxu0 0.0
    %298 = vmatmul.mubr.f32.gmra.mxu0 %v218
    %v299 = vpop.f32.mrf.mxu0
    %v300 = vadd.f32 %v203, %v299
    %v301 = vpop.f32.mrf.mxu0
    %302 = vmatprep.mubr.f32.mxu0 0.0
    %303 = vmatmul.mubr.f32.gmra.mxu0 %v221
    %v304 = vpop.f32.mrf.mxu0
    %v305 = vadd.f32 %v208, %v304
    %v306 = vpop.f32.mrf.mxu0
    %307 = vdwg.mxu0
    %v308 = vtanh.pop %v290
    %v309 = vtanh.pop %v295
    %v310 = vmul.f32 %v300, 0.5
    %v311 = vmul.f32 %v305, 0.5
    %v312 = vtanh.pop %v310
    %v313 = vtanh.pop %v311
    %v314 = vmul.f32 %v312, 0.5
    %v315 = vmul.f32 %v313, 0.5
    %v316 = vadd.f32 %v314, 0.5
    %v317 = vadd.f32 %v315, 0.5
    %v318 = vmul.f32 %v308, %v316
    %v319 = vmul.f32 %v309, %v317
    %v320 = vld [vmem:[%s5] sm:$0xff]
    %v321 = vld [vmem:[%s5 + $0x8] sm:$0xff]
    %v322 = vld [vmem:[%s6] sm:$0xff]
    %v323 = vld [vmem:[%s6 + $0x8] sm:$0xff]
    %324 = vadd.xlane.f32.xlu0 %v318
    %v325 = vpop.xlane.xlu0 %324
    %326 = vadd.xlane.f32.xlu0 %v319
    %v327 = vpop.xlane.xlu0 %326
    %v328 = vmul.f32 %v318, %v318
    %v329 = vmul.f32 %v319, %v319
    %330 = vadd.xlane.f32.xlu0 %v328
    %v331 = vpop.xlane.xlu0 %330
    %332 = vadd.xlane.f32.xlu0 %v329
    %v333 = vpop.xlane.xlu0 %332
    %v334 = vmul.f32 %v325, 0.0078125
    %v335 = vmul.f32 %v327, 0.0078125
    %v336 = vmul.f32 %v331, 0.0078125
    %v337 = vmul.f32 %v333, 0.0078125
    %v338 = vmul.f32 %v334, %v334
    %v339 = vmul.f32 %v335, %v335
    %v340 = vsub.f32 %v336, %v338
    %v341 = vsub.f32 %v337, %v339
    %v342 = vmax.f32 %v340, 0.0
    %v343 = vmax.f32 %v341, 0.0
    %v344 = vadd.f32 %v342, 1e-05
    %v345 = vadd.f32 %v343, 1e-05
    %v346 = vrsqrt.pop %v344
    %v347 = vrsqrt.pop %v345
    %v348 = vsub.f32 %v318, %v334
    %v349 = vsub.f32 %v319, %v335
    %v350 = vmul.f32 %v346, %v320
    %v351 = vmul.f32 %v347, %v321
    %353 = vset.pattern.permute.xlu0 0
    %354 = vperm.xlu0 %353, %v350
    %v355 = vpop.permute.xlu0 %354
    %358 = vset.pattern.permute.xlu0 0
    %359 = vperm.xlu0 %358, %v351
    %v360 = vpop.permute.xlu0 %359
    %v362 = vmul.f32 %v348, %v355
    %v363 = vmul.f32 %v349, %v360
    %365 = vset.pattern.permute.xlu0 0
    %366 = vperm.xlu0 %365, %v322
    %v367 = vpop.permute.xlu0 %366
    %370 = vset.pattern.permute.xlu0 0
    %371 = vperm.xlu0 %370, %v323
    %v372 = vpop.permute.xlu0 %371
    %v374 = vadd.f32 %v362, %v367
    %v375 = vadd.f32 %v363, %v372
    %v376 = vadd.f32 %v154, %v374
    %v377 = vadd.f32 %v159, %v375
    %v378 = vld [vmem:[%s7] sm:$0xff]
    %v379 = vld [vmem:[%s7 + $0x8] sm:$0xff]
    %v380 = vld [vmem:[%s7 + $0x10] sm:$0xff]
    %v381 = vld [vmem:[%s7 + $0x18] sm:$0xff]
    %v382 = vld [vmem:[%s8] sm:$0xff]
    %v383 = vld [vmem:[%s8 + $0x8] sm:$0xff]
    %v384 = vld [vmem:[%s8 + $0x10] sm:$0xff]
    %v385 = vld [vmem:[%s8 + $0x18] sm:$0xff]
    %386 = vadd.xlane.f32.xlu0 %v374
    %v387 = vpop.xlane.xlu0 %386
    %388 = vadd.xlane.f32.xlu0 %v375
    %v389 = vpop.xlane.xlu0 %388
    %v390 = vmul.f32 %v374, %v374
    %v391 = vmul.f32 %v375, %v375
    %392 = vadd.xlane.f32.xlu0 %v390
    %v393 = vpop.xlane.xlu0 %392
    %394 = vadd.xlane.f32.xlu0 %v391
    %v395 = vpop.xlane.xlu0 %394
    %v396 = vmul.f32 %v387, 0.0078125
    %v397 = vmul.f32 %v389, 0.0078125
    %v398 = vmul.f32 %v393, 0.0078125
    %v399 = vmul.f32 %v395, 0.0078125
    %v400 = vmul.f32 %v396, %v396
    %v401 = vmul.f32 %v397, %v397
    %v402 = vsub.f32 %v398, %v400
    %v403 = vsub.f32 %v399, %v401
    %v404 = vmax.f32 %v402, 0.0
    %v405 = vmax.f32 %v403, 0.0
    %v406 = vadd.f32 %v404, 1e-05
    %v407 = vadd.f32 %v405, 1e-05
    %v408 = vrsqrt.pop %v406
    %v409 = vrsqrt.pop %v407
    %v410 = vsub.f32 %v374, %v396
    %v411 = vsub.f32 %v375, %v397
    %v412 = vmul.f32 %v410, %v408
    %v413 = vmul.f32 %v411, %v409
    %415 = vset.pattern.permute.xlu0 0
    %416 = vperm.xlu0 %415, %v378
    %v417 = vpop.permute.xlu0 %416
    %420 = vset.pattern.permute.xlu0 0
    %421 = vperm.xlu0 %420, %v379
    %v422 = vpop.permute.xlu0 %421
    %v424 = vmul.f32 %v412, %v417
    %v425 = vmul.f32 %v413, %v422
    %427 = vset.pattern.permute.xlu0 0
    %428 = vperm.xlu0 %427, %v382
    %v429 = vpop.permute.xlu0 %428
    %432 = vset.pattern.permute.xlu0 0
    %433 = vperm.xlu0 %432, %v383
    %v434 = vpop.permute.xlu0 %433
    %v436 = vadd.f32 %v424, %v429
    %v437 = vadd.f32 %v425, %v434
    %439 = vset.pattern.permute.xlu0 0
    %440 = vperm.xlu0 %439, %v380
    %v441 = vpop.permute.xlu0 %440
    %444 = vset.pattern.permute.xlu0 0
    %445 = vperm.xlu0 %444, %v381
    %v446 = vpop.permute.xlu0 %445
    %v448 = vmul.f32 %v412, %v441
    %v449 = vmul.f32 %v413, %v446
    %451 = vset.pattern.permute.xlu0 0
    %452 = vperm.xlu0 %451, %v384
    %v453 = vpop.permute.xlu0 %452
    %456 = vset.pattern.permute.xlu0 0
    %457 = vperm.xlu0 %456, %v385
    %v458 = vpop.permute.xlu0 %457
    %v460 = vadd.f32 %v448, %v453
    %v461 = vadd.f32 %v449, %v458
    %v462 = vtanh.pop %v436
    %v463 = vtanh.pop %v437
    %v464 = vmul.f32 %v460, 0.5
    %v465 = vmul.f32 %v461, 0.5
    %v466 = vtanh.pop %v464
    %v467 = vtanh.pop %v465
    %v468 = vmul.f32 %v466, 0.5
    %v469 = vmul.f32 %v467, 0.5
    %v470 = vadd.f32 %v468, 0.5
    %v471 = vadd.f32 %v469, 0.5
    %v472 = vmul.f32 %v462, %v470
    %v473 = vmul.f32 %v463, %v471
    %v474 = vld [vmem:[%s9] sm:$0xff]
    %v475 = vld [vmem:[%s9 + $0x8] sm:$0xff]
    %v476 = vld [vmem:[%s10] sm:$0xff]
    %v477 = vld [vmem:[%s10 + $0x8] sm:$0xff]
    %479 = vset.pattern.permute.xlu0 0
    %480 = vperm.xlu0 %479, %v476
    %v481 = vpop.permute.xlu0 %480
    %484 = vset.pattern.permute.xlu0 0
    %485 = vperm.xlu0 %484, %v477
    %v486 = vpop.permute.xlu0 %485
    %vm488 = vcmask 130048
    %v490 = vsel %vm488, %v474, 0
    %v493 = vsel %vm488, %v475, 0
    %495 = vmatprep.subr.mxu0 0.0
    %496 = vmatpush1.msra.mxu0 0.0
    %497 = vmatprep.subr.mxu0 0.0
    %498 = vmatpush1.msra.mxu0 0.0
    %499 = vmatprep.subr.mxu0 0.0
    %500 = vmatpush1.msra.mxu0 0.0
    %501 = vmatprep.subr.mxu0 0.0
    %502 = vmatpush1.msra.mxu0 0.0
    %503 = vmatprep.subr.mxu0 0.0
    %504 = vmatpush1.msra.mxu0 0.0
    %505 = vmatprep.subr.mxu0 0.0
    %506 = vmatpush1.msra.mxu0 0.0
    %507 = vmatprep.subr.mxu0 0.0
    %508 = vmatpush1.msra.mxu0 0.0
    %509 = vmatprep.subr.mxu0 0.0
    %510 = vmatpush1.msra.mxu0 0.0
    %511 = vmatprep.subr.mxu0 0.0
    %512 = vmatpush1.msra.mxu0 0.0
    %513 = vmatprep.subr.mxu0 0.0
    %514 = vmatpush1.msra.mxu0 0.0
    %515 = vmatprep.subr.mxu0 0.0
    %516 = vmatpush1.msra.mxu0 0.0
    %517 = vmatprep.subr.mxu0 0.0
    %518 = vmatpush1.msra.mxu0 0.0
    %519 = vmatprep.subr.mxu0 0.0
    %520 = vmatpush1.msra.mxu0 0.0
    %521 = vmatprep.subr.mxu0 0.0
    %522 = vmatpush1.msra.mxu0 0.0
    %523 = vmatprep.subr.mxu0 0.0
    %524 = vmatpush1.msra.mxu0 %v473
    %525 = vmatprep.subr.mxu0 0.0
    %526 = vmatpush1.msra.mxu0 %v472
    %527 = vmatprep.subr.mxu0 0.0
    %528 = vmatpush2.msra.mxu0 0.0
    %529 = vmatprep.subr.mxu0 0.0
    %530 = vmatpush2.msra.mxu0 0.0
    %531 = vmatprep.subr.mxu0 0.0
    %532 = vmatpush2.msra.mxu0 0.0
    %533 = vmatprep.subr.mxu0 0.0
    %534 = vmatpush2.msra.mxu0 0.0
    %535 = vmatprep.subr.mxu0 0.0
    %536 = vmatpush2.msra.mxu0 0.0
    %537 = vmatprep.subr.mxu0 0.0
    %538 = vmatpush2.msra.mxu0 0.0
    %539 = vmatprep.subr.mxu0 0.0
    %540 = vmatpush2.msra.mxu0 0.0
    %541 = vmatprep.subr.mxu0 0.0
    %542 = vmatpush2.msra.mxu0 0.0
    %543 = vmatprep.subr.mxu0 0.0
    %544 = vmatpush2.msra.mxu0 0.0
    %545 = vmatprep.subr.mxu0 0.0
    %546 = vmatpush2.msra.mxu0 0.0
    %547 = vmatprep.subr.mxu0 0.0
    %548 = vmatpush2.msra.mxu0 0.0
    %549 = vmatprep.subr.mxu0 0.0
    %550 = vmatpush2.msra.mxu0 0.0
    %551 = vmatprep.subr.mxu0 0.0
    %552 = vmatpush2.msra.mxu0 0.0
    %553 = vmatprep.subr.mxu0 0.0
    %554 = vmatpush2.msra.mxu0 0.0
    %555 = vmatprep.subr.mxu0 0.0
    %556 = vmatpush2.msra.mxu0 0.0
    %557 = vmatprep.subr.mxu0 0.0
    %558 = vmatpush2.msra.mxu0 0.0
    %559 = vmatprep.mubr.f32.mxu0 0.0
    %560 = vmatmul.mubr.f32.gmra.mxu0 %v490
    %v561 = vpop.f32.mrf.mxu0
    %v562 = vadd.f32 %v481, %v561
    %v563 = vpop.f32.mrf.mxu0
    %564 = vmatprep.mubr.f32.mxu0 0.0
    %565 = vmatmul.mubr.f32.gmra.mxu0 %v493
    %v566 = vpop.f32.mrf.mxu0
    %v567 = vadd.f32 %v486, %v566
    %v568 = vpop.f32.mrf.mxu0
    %569 = vdwg.mxu0
    %v570 = vadd.f32 %v376, %v562
    %v571 = vadd.f32 %v377, %v567
    %v572 = vld [vmem:[%s11] sm:$0xff]
    %v573 = vld [vmem:[%s11 + $0x8] sm:$0xff]
    %v574 = vld [vmem:[%s11 + $0x10] sm:$0xff]
    %v575 = vld [vmem:[%s11 + $0x18] sm:$0xff]
    %v576 = vld [vmem:[%s12] sm:$0xff]
    %v577 = vld [vmem:[%s12 + $0x8] sm:$0xff]
    %v578 = vld [vmem:[%s12 + $0x10] sm:$0xff]
    %v579 = vld [vmem:[%s12 + $0x18] sm:$0xff]
    %580 = vrot.lane.b32.xlu0 %v562, 2
    %v581 = vpop.permute.xlu0 %580
    %582 = vrot.lane.b32.xlu0 %v567, 2
    %v583 = vpop.permute.xlu0 %582
    %v584 = vadd.s32 %v64, 4294967294
    %vm585 = vcmp.ge.s32.totalorder %v584, 0
    %vm586 = vcmp.lt.s32.totalorder %v584, 64
    %vm587 = vmand %vm585, %vm586
    %v588 = vsel %vm587, %v581, 0.0
    %v589 = vsel %vm587, %v583, 0.0
    %590 = vrot.lane.b32.xlu0 %v562, 126
    %v591 = vpop.permute.xlu0 %590
    %592 = vrot.lane.b32.xlu0 %v567, 126
    %v593 = vpop.permute.xlu0 %592
    %v594 = vadd.s32 %v64, 2
    %vm595 = vcmp.ge.s32.totalorder %v594, 0
    %vm596 = vcmp.lt.s32.totalorder %v594, 64
    %vm597 = vmand %vm595, %vm596
    %v598 = vsel %vm597, %v591, 0.0
    %v599 = vsel %vm597, %v593, 0.0
    %601 = vset.pattern.permute.xlu0 0
    %602 = vperm.xlu0 %601, %v576
    %v603 = vpop.permute.xlu0 %602
    %606 = vset.pattern.permute.xlu0 0
    %607 = vperm.xlu0 %606, %v577
    %v608 = vpop.permute.xlu0 %607
    %611 = vset.pattern.permute.xlu0 0
    %612 = vperm.xlu0 %611, %v578
    %v613 = vpop.permute.xlu0 %612
    %616 = vset.pattern.permute.xlu0 0
    %617 = vperm.xlu0 %616, %v579
    %v618 = vpop.permute.xlu0 %617
    %v621 = vsel %vm210, %v572, 0
    %v624 = vsel %vm210, %v573, 0
    %v627 = vsel %vm210, %v574, 0
    %v630 = vsel %vm210, %v575, 0
    %632 = vmatprep.subr.mxu0 0.0
    %633 = vmatpush1.msra.mxu0 0.0
    %634 = vmatprep.subr.mxu0 0.0
    %635 = vmatpush1.msra.mxu0 0.0
    %636 = vmatprep.subr.mxu0 0.0
    %637 = vmatpush1.msra.mxu0 0.0
    %638 = vmatprep.subr.mxu0 0.0
    %639 = vmatpush1.msra.mxu0 0.0
    %640 = vmatprep.subr.mxu0 0.0
    %641 = vmatpush1.msra.mxu0 0.0
    %642 = vmatprep.subr.mxu0 0.0
    %643 = vmatpush1.msra.mxu0 0.0
    %644 = vmatprep.subr.mxu0 0.0
    %645 = vmatpush1.msra.mxu0 0.0
    %646 = vmatprep.subr.mxu0 0.0
    %647 = vmatpush1.msra.mxu0 0.0
    %648 = vmatprep.subr.mxu0 0.0
    %649 = vmatpush1.msra.mxu0 0.0
    %650 = vmatprep.subr.mxu0 0.0
    %651 = vmatpush1.msra.mxu0 0.0
    %652 = vmatprep.subr.mxu0 0.0
    %653 = vmatpush1.msra.mxu0 %v599
    %654 = vmatprep.subr.mxu0 0.0
    %655 = vmatpush1.msra.mxu0 %v598
    %656 = vmatprep.subr.mxu0 0.0
    %657 = vmatpush1.msra.mxu0 %v567
    %658 = vmatprep.subr.mxu0 0.0
    %659 = vmatpush1.msra.mxu0 %v562
    %660 = vmatprep.subr.mxu0 0.0
    %661 = vmatpush1.msra.mxu0 %v589
    %662 = vmatprep.subr.mxu0 0.0
    %663 = vmatpush1.msra.mxu0 %v588
    %664 = vmatprep.subr.mxu0 0.0
    %665 = vmatpush2.msra.mxu0 0.0
    %666 = vmatprep.subr.mxu0 0.0
    %667 = vmatpush2.msra.mxu0 0.0
    %668 = vmatprep.subr.mxu0 0.0
    %669 = vmatpush2.msra.mxu0 0.0
    %670 = vmatprep.subr.mxu0 0.0
    %671 = vmatpush2.msra.mxu0 0.0
    %672 = vmatprep.subr.mxu0 0.0
    %673 = vmatpush2.msra.mxu0 0.0
    %674 = vmatprep.subr.mxu0 0.0
    %675 = vmatpush2.msra.mxu0 0.0
    %676 = vmatprep.subr.mxu0 0.0
    %677 = vmatpush2.msra.mxu0 0.0
    %678 = vmatprep.subr.mxu0 0.0
    %679 = vmatpush2.msra.mxu0 0.0
    %680 = vmatprep.subr.mxu0 0.0
    %681 = vmatpush2.msra.mxu0 0.0
    %682 = vmatprep.subr.mxu0 0.0
    %683 = vmatpush2.msra.mxu0 0.0
    %684 = vmatprep.subr.mxu0 0.0
    %685 = vmatpush2.msra.mxu0 0.0
    %686 = vmatprep.subr.mxu0 0.0
    %687 = vmatpush2.msra.mxu0 0.0
    %688 = vmatprep.subr.mxu0 0.0
    %689 = vmatpush2.msra.mxu0 0.0
    %690 = vmatprep.subr.mxu0 0.0
    %691 = vmatpush2.msra.mxu0 0.0
    %692 = vmatprep.subr.mxu0 0.0
    %693 = vmatpush2.msra.mxu0 0.0
    %694 = vmatprep.subr.mxu0 0.0
    %695 = vmatpush2.msra.mxu0 0.0
    %696 = vmatprep.mubr.f32.mxu0 0.0
    %697 = vmatmul.mubr.f32.gmra.mxu0 %v621
    %v698 = vpop.f32.mrf.mxu0
    %v699 = vadd.f32 %v603, %v698
    %v700 = vpop.f32.mrf.mxu0
    %701 = vmatprep.mubr.f32.mxu0 0.0
    %702 = vmatmul.mubr.f32.gmra.mxu0 %v624
    %v703 = vpop.f32.mrf.mxu0
    %v704 = vadd.f32 %v608, %v703
    %v705 = vpop.f32.mrf.mxu0
    %706 = vmatprep.mubr.f32.mxu0 0.0
    %707 = vmatmul.mubr.f32.gmra.mxu0 %v627
    %v708 = vpop.f32.mrf.mxu0
    %v709 = vadd.f32 %v613, %v708
    %v710 = vpop.f32.mrf.mxu0
    %711 = vmatprep.mubr.f32.mxu0 0.0
    %712 = vmatmul.mubr.f32.gmra.mxu0 %v630
    %v713 = vpop.f32.mrf.mxu0
    %v714 = vadd.f32 %v618, %v713
    %v715 = vpop.f32.mrf.mxu0
    %716 = vdwg.mxu0
    %v717 = vtanh.pop %v699
    %v718 = vtanh.pop %v704
    %v719 = vmul.f32 %v709, 0.5
    %v720 = vmul.f32 %v714, 0.5
    %v721 = vtanh.pop %v719
    %v722 = vtanh.pop %v720
    %v723 = vmul.f32 %v721, 0.5
    %v724 = vmul.f32 %v722, 0.5
    %v725 = vadd.f32 %v723, 0.5
    %v726 = vadd.f32 %v724, 0.5
    %v727 = vmul.f32 %v717, %v725
    %v728 = vmul.f32 %v718, %v726
    %v729 = vld [vmem:[%s13] sm:$0xff]
    %v730 = vld [vmem:[%s13 + $0x8] sm:$0xff]
    %v731 = vld [vmem:[%s14] sm:$0xff]
    %v732 = vld [vmem:[%s14 + $0x8] sm:$0xff]
    %733 = vadd.xlane.f32.xlu0 %v727
    %v734 = vpop.xlane.xlu0 %733
    %735 = vadd.xlane.f32.xlu0 %v728
    %v736 = vpop.xlane.xlu0 %735
    %v737 = vmul.f32 %v727, %v727
    %v738 = vmul.f32 %v728, %v728
    %739 = vadd.xlane.f32.xlu0 %v737
    %v740 = vpop.xlane.xlu0 %739
    %741 = vadd.xlane.f32.xlu0 %v738
    %v742 = vpop.xlane.xlu0 %741
    %v743 = vmul.f32 %v734, 0.0078125
    %v744 = vmul.f32 %v736, 0.0078125
    %v745 = vmul.f32 %v740, 0.0078125
    %v746 = vmul.f32 %v742, 0.0078125
    %v747 = vmul.f32 %v743, %v743
    %v748 = vmul.f32 %v744, %v744
    %v749 = vsub.f32 %v745, %v747
    %v750 = vsub.f32 %v746, %v748
    %v751 = vmax.f32 %v749, 0.0
    %v752 = vmax.f32 %v750, 0.0
    %v753 = vadd.f32 %v751, 1e-05
    %v754 = vadd.f32 %v752, 1e-05
    %v755 = vrsqrt.pop %v753
    %v756 = vrsqrt.pop %v754
    %v757 = vsub.f32 %v727, %v743
    %v758 = vsub.f32 %v728, %v744
    %v759 = vmul.f32 %v755, %v729
    %v760 = vmul.f32 %v756, %v730
    %762 = vset.pattern.permute.xlu0 0
    %763 = vperm.xlu0 %762, %v759
    %v764 = vpop.permute.xlu0 %763
    %767 = vset.pattern.permute.xlu0 0
    %768 = vperm.xlu0 %767, %v760
    %v769 = vpop.permute.xlu0 %768
    %v771 = vmul.f32 %v757, %v764
    %v772 = vmul.f32 %v758, %v769
    %774 = vset.pattern.permute.xlu0 0
    %775 = vperm.xlu0 %774, %v731
    %v776 = vpop.permute.xlu0 %775
    %779 = vset.pattern.permute.xlu0 0
    %780 = vperm.xlu0 %779, %v732
    %v781 = vpop.permute.xlu0 %780
    %v783 = vadd.f32 %v771, %v776
    %v784 = vadd.f32 %v772, %v781
    %v785 = vadd.f32 %v570, %v783
    %v786 = vadd.f32 %v571, %v784
    %787 = vst [vmem:[#allocation2] sm:$0xff] %v785
    %788 = vst [vmem:[#allocation2 + $0x8] sm:$0xff] %v786
    // Predicated region
    $region62: #{tpu_custom_call.1} parent=1 // pred_check
      _
    $region63: #{tpu_custom_call.1} parent=1 // pred_check_branch
      %790 = sbr.rel (0) target = $region65
    $region64: #{tpu_custom_call.1} parent=1 // pred_region
      %s792 = ssub.s32 256, 256
      %793 = vsyncadd [#allocation3], %s792
      %s794 = sshll.u32 [#allocation2], 4
      %s795 = int_to_ptr.vmem [resolvable:$true] %s794
      %800 = dma.vmem_to_hbm [thread:$0]  %s795, 256, %s15, [#allocation3], 128, 128, 8
    $region65: #{tpu_custom_call.1} parent=1 // pred_fallthru
      _
    // Predicated region
    $region66: #{tpu_custom_call.1} parent=1 // pred_check
      _
    $region67: #{tpu_custom_call.1} parent=1 // pred_check_branch
      %802 = sbr.rel (0) target = $region69
    $region68: #{tpu_custom_call.1} parent=1 // pred_region
      %803 = dma.done [#allocation3], 256
    $region69: #{tpu_custom_call.1} parent=1 // pred_fallthru
      _
    %804 = vsyncpa [#allocation3], 1

</llo_original>
